<compile_context>
chip_gen: v7x
topology: tpu7x:2x2x1
jax: 0.10.0
libtpu: 0.0.40
codegen_flags: <defaults>
</compile_context>

<pallas_src>
import math

import jax
import jax.numpy as jnp
from jax.experimental import pallas as pl
from jax.experimental.pallas import tpu as pltpu

_SQRT_2_OVER_PI = math.sqrt(2.0 / math.pi)


def _gelu_tanh(x):
    # BERT-style tanh GELU approximation (kept in f32 inside the kernel).
    return 0.5 * x * (1.0 + jnp.tanh(_SQRT_2_OVER_PI * (x + 0.044715 * x * x * x)))


# --------------------------------------------------------------------------
# Kernels
# --------------------------------------------------------------------------

def ffn_kernel_resident(x_ref, w1_ref, b1_ref, w2_ref, b2_ref, o_ref):
    """Both weight matrices fully VMEM-resident; grid = (row tiles,)."""
    h = jnp.dot(x_ref[...], w1_ref[...], preferred_element_type=jnp.float32)
    h = _gelu_tanh(h + b1_ref[...].astype(jnp.float32))
    # TODO(synk): training-mode dropout is identity here (inference mode).
    y = jnp.dot(h.astype(w2_ref.dtype), w2_ref[...],
                preferred_element_type=jnp.float32)
    o_ref[...] = (y + b2_ref[...].astype(jnp.float32)).astype(o_ref.dtype)


def ffn_kernel_chunked(x_ref, w1_ref, b1_ref, w2_ref, b2_ref, o_ref, acc_ref):
    """d_ff chunked along grid axis 1; f32 VMEM accumulator for matmul #2."""
    k = pl.program_id(1)

    h = jnp.dot(x_ref[...], w1_ref[...], preferred_element_type=jnp.float32)
    h = _gelu_tanh(h + b1_ref[...].astype(jnp.float32))
    # TODO(synk): dropout between gelu and w_2 is identity (inference mode).
    contrib = jnp.dot(h.astype(w2_ref.dtype), w2_ref[...],
                      preferred_element_type=jnp.float32)

    @pl.when(k == 0)
    def _():
        acc_ref[...] = contrib            # no separate zero-fill pass

    @pl.when(k > 0)
    def _():
        acc_ref[...] += contrib

    @pl.when(k == pl.num_programs(1) - 1)
    def _():
        o_ref[...] = (acc_ref[...] + b2_ref[...].astype(jnp.float32)
                      ).astype(o_ref.dtype)


# --------------------------------------------------------------------------
# VMEM / generation aware tile selection
# --------------------------------------------------------------------------

def _round_up(x, m):
    return ((x + m - 1) // m) * m


def _round_down(x, m):
    return (x // m) * m


def _tpu_budget():
    """Returns (vmem_limit_bytes to request, usable tile byte budget, num TCs)."""
    kind = ""
    try:
        kind = jax.devices()[0].device_kind.lower()
    except Exception:
        pass
    cap = None
    try:
        cap = int(getattr(pltpu.get_tpu_info(), "vmem_capacity_bytes"))
    except Exception:
        cap = None
    is_v7 = any(tag in kind for tag in ("v7", "tpu7", "7x"))
    if cap is None:
        cap = (64 << 20) if is_v7 else (128 << 20)
    cores = 2 if (is_v7 or cap <= (64 << 20)) else 1
    vmem_limit = (cap // 8) * 7          # ~56 MiB on v7x, ~112 MiB on v5e/v6e
    budget = int(vmem_limit * 0.85)      # headroom for compiler-internal scratch
    return vmem_limit, budget, cores


def _choose_tiles(rows, d_model, d_ff, itemsize, budget, cores,
                  tile_rows=None, tile_ff=None):
    """Pick (tile_rows, tile_ff). tile_ff == d_ff means fully resident weights."""
    sub = 16 if itemsize < 4 else 8
    rows_aligned = _round_up(max(rows, 1), sub)

    # v7x megacore: keep >= `cores` row tiles so the "parallel" axis spans both TCs.
    max_tr = rows_aligned
    if cores > 1 and rows_aligned >= 2 * sub:
        max_tr = max(sub, _round_down(rows_aligned // cores, sub))

    def resident_bytes(tr):
        return (2 * d_model * d_ff * itemsize          # w1 + w2 (single-buffered)
                + 4 * tr * d_model * itemsize          # x + out (double-buffered)
                + tr * d_ff * (4 + itemsize)           # f32 GELU intermediate + cast
                + 2 * (d_ff + d_model) * itemsize)     # biases

    def chunked_bytes(tr, tf):
        return (4 * d_model * tf * itemsize            # w1/w2 chunks (double-buffered)
                + 4 * tr * d_model * itemsize          # x + out (double-buffered)
                + 4 * tr * d_model                     # f32 accumulator scratch
                + tr * tf * (4 + itemsize)             # f32 GELU intermediate + cast
                + 2 * (tf + d_model) * itemsize)       # biases

    if tile_rows is not None:
        forced_tr = max(sub, _round_up(min(tile_rows, rows_aligned), sub))
        row_cands = [forced_tr]
    else:
        cands = {c for c in (2048, 1536, 1024, 768, 512, 384, 256, 128, 64, 32, 16, 8)
                 if c % sub == 0 and c <= max_tr}
        cands.add(max_tr)
        row_cands = sorted(cands, reverse=True)

    # 1) Prefer fully resident weights (weights DMA'd once, kernel MXU-bound).
    if tile_ff is None or tile_ff == d_ff:
        for tr in row_cands:
            if resident_bytes(tr) <= budget:
                return tr, d_ff
        if tile_ff == d_ff:               # caller forced residency
            return row_cands[-1], d_ff

    # 2) Chunk d_ff; keep row tiles as tall as VMEM allows (stream intensity).
    if tile_ff is not None:
        ff_cands = [tile_ff]
    else:
        ff_cands = [c for c in (4096, 2048, 1024, 512, 256, 128)
                    if c < d_ff and d_ff % c == 0]
        if not ff_cands:
            ff_cands = [d_ff]
    for tr in row_cands:
        for tf in ff_cands:
            if chunked_bytes(tr, tf) <= budget:
                return tr, tf
    return row_cands[-1], ff_cands[-1]


# --------------------------------------------------------------------------
# pallas_call builder + public wrapper
# --------------------------------------------------------------------------

def _ffn_pallas_call(x2, w1, b1_2, w2, b2_2, out_dtype, tile_rows, tile_ff,
                     vmem_limit, single_buffer_const):
    rows_p, d_model = x2.shape
    d_ff = w1.shape[1]
    n_row = rows_p // tile_rows

    def spec(shape, index_map, constant_index):
        if single_buffer_const and constant_index:
            # Constant-index block: never re-fetched -> one buffer is enough.
            return pl.BlockSpec(shape, index_map, pipeline_mode=pl.Buffered(1))
        return pl.BlockSpec(shape, index_map)

    if tile_ff == d_ff:
        # Resident-weight path: single grid axis over row tiles, no scratch.
        grid = (n_row,)
        in_specs = [
            spec((tile_rows, d_model), lambda i: (i, 0), False),
            spec((d_model, d_ff), lambda i: (0, 0), True),
            spec((1, d_ff), lambda i: (0, 0), True),
            spec((d_ff, d_model), lambda i: (0, 0), True),
            spec((1, d_model), lambda i: (0, 0), True),
        ]
        out_specs = pl.BlockSpec((tile_rows, d_model), lambda i: (i, 0))
        scratch_shapes = []
        kernel = ffn_kernel_resident
        dims = ("parallel",)
    else:
        # Chunked path: reduction over d_ff chunks on the last ("arbitrary") axis.
        grid = (n_row, d_ff // tile_ff)
        in_specs = [
            spec((tile_rows, d_model), lambda i, k: (i, 0), False),
            spec((d_model, tile_ff), lambda i, k: (0, k), False),
            spec((1, tile_ff), lambda i, k: (0, k), False),
            spec((tile_ff, d_model), lambda i, k: (k, 0), False),
            spec((1, d_model), lambda i, k: (0, 0), True),
        ]
        out_specs = pl.BlockSpec((tile_rows, d_model), lambda i, k: (i, 0))
        scratch_shapes = [pltpu.VMEM((tile_rows, d_model), jnp.float32)]
        kernel = ffn_kernel_chunked
        dims = ("parallel", "arbitrary")

    return pl.pallas_call(
        kernel,
        out_shape=jax.ShapeDtypeStruct((rows_p, d_model), out_dtype),
        grid_spec=pltpu.PrefetchScalarGridSpec(
            num_scalar_prefetch=0,
            grid=grid,
            in_specs=in_specs,
            out_specs=out_specs,
            scratch_shapes=scratch_shapes,
        ),
        compiler_params=pltpu.CompilerParams(
            dimension_semantics=dims,
            vmem_limit_bytes=int(vmem_limit),
        ),
    )(x2, w1, b1_2, w2, b2_2)


def position_wise_feed_forward(x, w1, b1, w2, b2, *, tile_rows=None, tile_ff=None,
                               cast_operands_to_bf16=False):
    """x: (B, S, d_model). Weights pre-transposed: w1 (d_model, d_ff),
    w2 (d_ff, d_model). Returns (y, None) like the PyTorch module."""
    B, S, d_model = x.shape
    d_ff = w1.shape[1]
    rows = B * S
    out_dtype = x.dtype

    x2 = x.reshape(rows, d_model)
    if cast_operands_to_bf16 and x2.dtype == jnp.float32:
        # v6e/v7x MXU peak needs bf16 operands; f32 accumulation stays in-kernel.
        x2 = x2.astype(jnp.bfloat16)
        w1 = w1.astype(jnp.bfloat16)
        w2 = w2.astype(jnp.bfloat16)

    if tile_ff is not None:
        assert d_ff % tile_ff == 0, "tile_ff must divide d_ff"

    itemsize = jnp.dtype(x2.dtype).itemsize
    vmem_limit, budget, cores = _tpu_budget()
    tr, tf = _choose_tiles(rows, d_model, d_ff, itemsize, budget, cores,
                           tile_rows=tile_rows, tile_ff=tile_ff)

    rows_p = _round_up(rows, tr)
    if rows_p != rows:
        x2 = jnp.pad(x2, ((0, rows_p - rows), (0, 0)))
    b1_2 = b1.reshape(1, d_ff)
    b2_2 = b2.reshape(1, d_model)

    try:
        out = _ffn_pallas_call(x2, w1, b1_2, w2, b2_2, out_dtype, tr, tf,
                               vmem_limit, single_buffer_const=True)
    except Exception:
        # pipeline_mode=pl.Buffered(1) not supported on this build ->
        # fall back to default double-buffering.
        out = _ffn_pallas_call(x2, w1, b1_2, w2, b2_2, out_dtype, tr, tf,
                               vmem_limit, single_buffer_const=False)

    if rows_p != rows:
        out = out[:rows]
    return out.reshape(B, S, d_model), None


# --------------------------------------------------------------------------
# Params / reference / self-test
# --------------------------------------------------------------------------

def init_params(key, d_model, d_ff, dtype=jnp.float32):
    """Deterministic init mimicking torch.nn.Linear (uniform +/- 1/sqrt(fan_in)).
    Weights returned pre-transposed: w1 (d_model, d_ff), w2 (d_ff, d_model)."""
    k1, k2, k3, k4 = jax.random.split(key, 4)
    lim1 = 1.0 / math.sqrt(d_model)
    lim2 = 1.0 / math.sqrt(d_ff)
    w1 = jax.random.uniform(k1, (d_model, d_ff), dtype, -lim1, lim1)
    b1 = jax.random.uniform(k2, (d_ff,), dtype, -lim1, lim1)
    w2 = jax.random.uniform(k3, (d_ff, d_model), dtype, -lim2, lim2)
    b2 = jax.random.uniform(k4, (d_model,), dtype, -lim2, lim2)
    return w1, b1, w2, b2


def _reference(x, w1, b1, w2, b2):
    hp = jax.lax.Precision.HIGHEST
    h = _gelu_tanh(jnp.dot(x.astype(jnp.float32), w1.astype(jnp.float32),
                           precision=hp) + b1.astype(jnp.float32))
    return jnp.dot(h, w2.astype(jnp.float32), precision=hp) + b2.astype(jnp.float32)


if __name__ == "__main__":
    key = jax.random.PRNGKey(0)
    # MXU matmuls may use bf16 multiply passes for f32 operands depending on
    # generation/precision defaults, so compare with a modest tolerance.
    ATOL = RTOL = 2e-2

    # --- Test 1: module-like small shape; resident-weight (single-step) path. ---
    B, S, d_model, d_ff = 2, 8, 32, 64
    kx, kp, key = jax.random.split(key, 3)
    x = jax.random.normal(kx, (B, S, d_model), jnp.float32)
    w1, b1, w2, b2 = init_params(kp, d_model, d_ff)
    y, aux = position_wise_feed_forward(x, w1, b1, w2, b2)
    y = jax.block_until_ready(y)
    assert aux is None
    ref = _reference(x, w1, b1, w2, b2)
    assert jnp.allclose(y, ref, atol=ATOL, rtol=RTOL), "test1 mismatch"

    # --- Test 2: forced d_ff chunking (2 reduction steps) + accumulator path. ---
    B, S, d_model, d_ff = 2, 8, 128, 256
    kx, kp, key = jax.random.split(key, 3)
    x = jax.random.normal(kx, (B, S, d_model), jnp.float32)
    w1, b1, w2, b2 = init_params(kp, d_model, d_ff)
    y, _ = position_wise_feed_forward(x, w1, b1, w2, b2, tile_ff=128)
    y = jax.block_until_ready(y)
    ref = _reference(x, w1, b1, w2, b2)
    assert jnp.allclose(y, ref, atol=ATOL, rtol=RTOL), "test2 mismatch"

    # --- Test 3: rows not divisible by the sublane tile -> wrapper pads/slices. ---
    B, S, d_model, d_ff = 2, 9, 32, 64
    kx, kp, key = jax.random.split(key, 3)
    x = jax.random.normal(kx, (B, S, d_model), jnp.float32)
    w1, b1, w2, b2 = init_params(kp, d_model, d_ff)
    y, _ = position_wise_feed_forward(x, w1, b1, w2, b2)
    y = jax.block_until_ready(y)
    ref = _reference(x, w1, b1, w2, b2)
    assert jnp.allclose(y, ref, atol=ATOL, rtol=RTOL), "test3 mismatch"

    print("KERNEL_OK")
</pallas_src>

<mosaic_0001>
module attributes {stable_mosaic.version = 11 : i64} {
  func.func @ffn_kernel_resident(%arg0: i32, %arg1: memref<16x32xf32, #tpu.memory_space<vmem>>, %arg2: memref<32x64xf32, #tpu.memory_space<vmem>>, %arg3: memref<1x64xf32, #tpu.memory_space<vmem>>, %arg4: memref<64x32xf32, #tpu.memory_space<vmem>>, %arg5: memref<1x32xf32, #tpu.memory_space<vmem>>, %arg6: memref<16x32xf32, #tpu.memory_space<vmem>>) attributes {dimension_semantics = [#tpu.dimension_semantics<parallel>], iteration_bounds = array<i64: 1>, scalar_prefetch = 0 : i64, scratch_operands = 0 : i64, tpu.core_type = #tpu.core_type<tc>, window_params = [{transform_indices = @transform_0, window_bounds = array<i64: 16, 32>}, {pipeline_mode = #tpu.pipeline_mode<synchronous>, transform_indices = @transform_1, window_bounds = array<i64: 32, 64>}, {pipeline_mode = #tpu.pipeline_mode<synchronous>, transform_indices = @transform_2, window_bounds = array<i64: 1, 64>}, {pipeline_mode = #tpu.pipeline_mode<synchronous>, transform_indices = @transform_3, window_bounds = array<i64: 64, 32>}, {pipeline_mode = #tpu.pipeline_mode<synchronous>, transform_indices = @transform_4, window_bounds = array<i64: 1, 32>}, {transform_indices = @transform_5, window_bounds = array<i64: 16, 32>}]} {
    %c0 = arith.constant 0 : index
    %c0_0 = arith.constant 0 : index
    %0 = vector.load %arg1[%c0, %c0_0] : memref<16x32xf32, #tpu.memory_space<vmem>>, vector<16x32xf32>
    %c0_1 = arith.constant 0 : index
    %c0_2 = arith.constant 0 : index
    %1 = vector.load %arg2[%c0_1, %c0_2] : memref<32x64xf32, #tpu.memory_space<vmem>>, vector<32x64xf32>
    %cst = arith.constant dense<0.000000e+00> : vector<16x64xf32>
    %2 = tpu.matmul %0, %1, %cst {dimension_numbers = #tpu.dot_dimension_numbers<[1], [0], [0], [1], [0, 0, 1, 1], [], []>} : vector<16x32xf32>, vector<32x64xf32>, vector<16x64xf32> -> vector<16x64xf32>
    %c0_3 = arith.constant 0 : index
    %c0_4 = arith.constant 0 : index
    %3 = vector.load %arg3[%c0_3, %c0_4] : memref<1x64xf32, #tpu.memory_space<vmem>>, vector<1x64xf32>
    %4 = vector.broadcast %3 : vector<1x64xf32> to vector<16x64xf32>
    %5 = arith.addf %2, %4 : vector<16x64xf32>
    %cst_5 = arith.constant 5.000000e-01 : f32
    %6 = vector.broadcast %cst_5 : f32 to vector<16x64xf32>
    %7 = arith.mulf %6, %5 : vector<16x64xf32>
    %cst_6 = arith.constant 4.471500e-02 : f32
    %8 = vector.broadcast %cst_6 : f32 to vector<16x64xf32>
    %9 = arith.mulf %8, %5 : vector<16x64xf32>
    %10 = arith.mulf %9, %5 : vector<16x64xf32>
    %11 = arith.mulf %10, %5 : vector<16x64xf32>
    %12 = arith.addf %5, %11 : vector<16x64xf32>
    %cst_7 = arith.constant 0.797884583 : f32
    %13 = vector.broadcast %cst_7 : f32 to vector<16x64xf32>
    %14 = arith.mulf %13, %12 : vector<16x64xf32>
    %15 = math.tanh %14 : vector<16x64xf32>
    %cst_8 = arith.constant 1.000000e+00 : f32
    %16 = vector.broadcast %cst_8 : f32 to vector<16x64xf32>
    %17 = arith.addf %16, %15 : vector<16x64xf32>
    %18 = arith.mulf %7, %17 : vector<16x64xf32>
    %c0_9 = arith.constant 0 : index
    %c0_10 = arith.constant 0 : index
    %19 = vector.load %arg4[%c0_9, %c0_10] : memref<64x32xf32, #tpu.memory_space<vmem>>, vector<64x32xf32>
    %cst_11 = arith.constant dense<0.000000e+00> : vector<16x32xf32>
    %20 = tpu.matmul %18, %19, %cst_11 {dimension_numbers = #tpu.dot_dimension_numbers<[1], [0], [0], [1], [0, 0, 1, 1], [], []>} : vector<16x64xf32>, vector<64x32xf32>, vector<16x32xf32> -> vector<16x32xf32>
    %c0_12 = arith.constant 0 : index
    %c0_13 = arith.constant 0 : index
    %21 = vector.load %arg5[%c0_12, %c0_13] : memref<1x32xf32, #tpu.memory_space<vmem>>, vector<1x32xf32>
    %22 = vector.broadcast %21 : vector<1x32xf32> to vector<16x32xf32>
    %23 = arith.addf %20, %22 : vector<16x32xf32>
    %c0_14 = arith.constant 0 : index
    %c0_15 = arith.constant 0 : index
    %24 = vector.load %arg6[%c0_14, %c0_15] : memref<16x32xf32, #tpu.memory_space<vmem>>, vector<16x32xf32>
    tpu.vector_store %arg6[%c0_14, %c0_15], %23 {strides = array<i32>} : memref<16x32xf32, #tpu.memory_space<vmem>>, vector<16x32xf32>,
    return
  }
  func.func @transform_0(%arg0: i32) -> (i32, i32) {
    %c0_i32 = arith.constant 0 : i32
    %c0_i32_0 = arith.constant 0 : i32
    return %arg0, %c0_i32 : i32, i32
  }
  func.func @transform_1(%arg0: i32) -> (i32, i32) {
    %c0_i32 = arith.constant 0 : i32
    %c0_i32_0 = arith.constant 0 : i32
    %c0_i32_1 = arith.constant 0 : i32
    return %c0_i32, %c0_i32_0 : i32, i32
  }
  func.func @transform_2(%arg0: i32) -> (i32, i32) {
    %c0_i32 = arith.constant 0 : i32
    %c0_i32_0 = arith.constant 0 : i32
    %c0_i32_1 = arith.constant 0 : i32
    return %c0_i32, %c0_i32_0 : i32, i32
  }
  func.func @transform_3(%arg0: i32) -> (i32, i32) {
    %c0_i32 = arith.constant 0 : i32
    %c0_i32_0 = arith.constant 0 : i32
    %c0_i32_1 = arith.constant 0 : i32
    return %c0_i32, %c0_i32_0 : i32, i32
  }
  func.func @transform_4(%arg0: i32) -> (i32, i32) {
    %c0_i32 = arith.constant 0 : i32
    %c0_i32_0 = arith.constant 0 : i32
    %c0_i32_1 = arith.constant 0 : i32
    return %c0_i32, %c0_i32_0 : i32, i32
  }
  func.func @transform_5(%arg0: i32) -> (i32, i32) {
    %c0_i32 = arith.constant 0 : i32
    %c0_i32_0 = arith.constant 0 : i32
    return %arg0, %c0_i32 : i32, i32
  }
}

module attributes {stable_mosaic.version = 11 : i64} {
  func.func @ffn_kernel_resident(%arg0: i32, %arg1: memref<16x32xf32, #tpu.memory_space<vmem>>, %arg2: memref<32x64xf32, #tpu.memory_space<vmem>>, %arg3: memref<1x64xf32, #tpu.memory_space<vmem>>, %arg4: memref<64x32xf32, #tpu.memory_space<vmem>>, %arg5: memref<1x32xf32, #tpu.memory_space<vmem>>, %arg6: memref<16x32xf32, #tpu.memory_space<vmem>>) attributes {dimension_semantics = [#tpu.dimension_semantics<parallel>], iteration_bounds = array<i64: 1>, scalar_prefetch = 0 : i64, scratch_operands = 0 : i64, tpu.core_type = #tpu.core_type<tc>, window_params = [{transform_indices = @transform_0, window_bounds = array<i64: 16, 32>}, {pipeline_mode = #tpu.pipeline_mode<synchronous>, transform_indices = @transform_1, window_bounds = array<i64: 32, 64>}, {pipeline_mode = #tpu.pipeline_mode<synchronous>, transform_indices = @transform_2, window_bounds = array<i64: 1, 64>}, {pipeline_mode = #tpu.pipeline_mode<synchronous>, transform_indices = @transform_3, window_bounds = array<i64: 64, 32>}, {pipeline_mode = #tpu.pipeline_mode<synchronous>, transform_indices = @transform_4, window_bounds = array<i64: 1, 32>}, {transform_indices = @transform_5, window_bounds = array<i64: 16, 32>}]} {
    %c0 = arith.constant 0 : index
    %c0_0 = arith.constant 0 : index
    %0 = vector.load %arg1[%c0, %c0_0] : memref<16x32xf32, #tpu.memory_space<vmem>>, vector<16x32xf32>
    %c0_1 = arith.constant 0 : index
    %c0_2 = arith.constant 0 : index
    %1 = vector.load %arg2[%c0_1, %c0_2] : memref<32x64xf32, #tpu.memory_space<vmem>>, vector<32x64xf32>
    %cst = arith.constant dense<0.000000e+00> : vector<16x64xf32>
    %2 = tpu.matmul %0, %1, %cst {dimension_numbers = #tpu.dot_dimension_numbers<[1], [0], [0], [1], [0, 0, 1, 1], [], []>} : vector<16x32xf32>, vector<32x64xf32>, vector<16x64xf32> -> vector<16x64xf32>
    %c0_3 = arith.constant 0 : index
    %c0_4 = arith.constant 0 : index
    %3 = vector.load %arg3[%c0_3, %c0_4] : memref<1x64xf32, #tpu.memory_space<vmem>>, vector<1x64xf32>
    %4 = vector.broadcast %3 : vector<1x64xf32> to vector<16x64xf32>
    %5 = arith.addf %2, %4 : vector<16x64xf32>
    %cst_5 = arith.constant 5.000000e-01 : f32
    %6 = vector.broadcast %cst_5 : f32 to vector<16x64xf32>
    %7 = arith.mulf %6, %5 : vector<16x64xf32>
    %cst_6 = arith.constant 4.471500e-02 : f32
    %8 = vector.broadcast %cst_6 : f32 to vector<16x64xf32>
    %9 = arith.mulf %8, %5 : vector<16x64xf32>
    %10 = arith.mulf %9, %5 : vector<16x64xf32>
    %11 = arith.mulf %10, %5 : vector<16x64xf32>
    %12 = arith.addf %5, %11 : vector<16x64xf32>
    %cst_7 = arith.constant 0.797884583 : f32
    %13 = vector.broadcast %cst_7 : f32 to vector<16x64xf32>
    %14 = arith.mulf %13, %12 : vector<16x64xf32>
    %15 = math.tanh %14 : vector<16x64xf32>
    %cst_8 = arith.constant 1.000000e+00 : f32
    %16 = vector.broadcast %cst_8 : f32 to vector<16x64xf32>
    %17 = arith.addf %16, %15 : vector<16x64xf32>
    %18 = arith.mulf %7, %17 : vector<16x64xf32>
    %c0_9 = arith.constant 0 : index
    %c0_10 = arith.constant 0 : index
    %19 = vector.load %arg4[%c0_9, %c0_10] : memref<64x32xf32, #tpu.memory_space<vmem>>, vector<64x32xf32>
    %cst_11 = arith.constant dense<0.000000e+00> : vector<16x32xf32>
    %20 = tpu.matmul %18, %19, %cst_11 {dimension_numbers = #tpu.dot_dimension_numbers<[1], [0], [0], [1], [0, 0, 1, 1], [], []>} : vector<16x64xf32>, vector<64x32xf32>, vector<16x32xf32> -> vector<16x32xf32>
    %c0_12 = arith.constant 0 : index
    %c0_13 = arith.constant 0 : index
    %21 = vector.load %arg5[%c0_12, %c0_13] : memref<1x32xf32, #tpu.memory_space<vmem>>, vector<1x32xf32>
    %22 = vector.broadcast %21 : vector<1x32xf32> to vector<16x32xf32>
    %23 = arith.addf %20, %22 : vector<16x32xf32>
    %c0_14 = arith.constant 0 : index
    %c0_15 = arith.constant 0 : index
    %24 = vector.load %arg6[%c0_14, %c0_15] : memref<16x32xf32, #tpu.memory_space<vmem>>, vector<16x32xf32>
    tpu.vector_store %arg6[%c0_14, %c0_15], %23 {strides = array<i32>} : memref<16x32xf32, #tpu.memory_space<vmem>>, vector<16x32xf32>,
    return
  }
  func.func @transform_0(%arg0: i32) -> (i32, i32) {
    %c0_i32 = arith.constant 0 : i32
    %c0_i32_0 = arith.constant 0 : i32
    return %arg0, %c0_i32 : i32, i32
  }
  func.func @transform_1(%arg0: i32) -> (i32, i32) {
    %c0_i32 = arith.constant 0 : i32
    %c0_i32_0 = arith.constant 0 : i32
    %c0_i32_1 = arith.constant 0 : i32
    return %c0_i32, %c0_i32_0 : i32, i32
  }
  func.func @transform_2(%arg0: i32) -> (i32, i32) {
    %c0_i32 = arith.constant 0 : i32
    %c0_i32_0 = arith.constant 0 : i32
    %c0_i32_1 = arith.constant 0 : i32
    return %c0_i32, %c0_i32_0 : i32, i32
  }
  func.func @transform_3(%arg0: i32) -> (i32, i32) {
    %c0_i32 = arith.constant 0 : i32
    %c0_i32_0 = arith.constant 0 : i32
    %c0_i32_1 = arith.constant 0 : i32
    return %c0_i32, %c0_i32_0 : i32, i32
  }
  func.func @transform_4(%arg0: i32) -> (i32, i32) {
    %c0_i32 = arith.constant 0 : i32
    %c0_i32_0 = arith.constant 0 : i32
    %c0_i32_1 = arith.constant 0 : i32
    return %c0_i32, %c0_i32_0 : i32, i32
  }
  func.func @transform_5(%arg0: i32) -> (i32, i32) {
    %c0_i32 = arith.constant 0 : i32
    %c0_i32_0 = arith.constant 0 : i32
    return %arg0, %c0_i32 : i32, i32
  }
}

</mosaic_0001>

<llo_original>
// kernel: tpu_custom_call.1
$region0: #{tpu_custom_call.1}
  #allocation0 [shape = 'u32[]', space=smem, size = 0x4, offset = 0x4, fixed_abs, tag = 'smem constant byte address 0x4 - core index']
  #allocation1 [shape = 'u32[144,128]{1,0:T(1,128)}', space=vmem, size = 0x12000, scoped, tag = 'internal scratch']
  %s0 = inlined_call_operand.hbm [shape: f32[16,32], index: 0, kind: input, shape index: {}]
  %s1 = inlined_call_operand.hbm [shape: f32[32,64], index: 1, kind: input, shape index: {}]
  %s2 = inlined_call_operand.hbm [shape: f32[1,64], index: 2, kind: input, shape index: {}]
  %s3 = inlined_call_operand.hbm [shape: f32[64,32], index: 3, kind: input, shape index: {}]
  %s4 = inlined_call_operand.hbm [shape: f32[1,32], index: 4, kind: input, shape index: {}]
  %s5 = inlined_call_operand.hbm [shape: f32[16,32], index: 5, kind: output, shape index: {}]
  %s6 = sld [smem:[#allocation0]]
  $region50: #{tpu_custom_call.1} parent=0
    _
  %s8 = ssub.s32 1, %s6
  %s9 = scalar_select 0, %s8, %s6
  $region1: #{tpu_custom_call.1} parent=0
    #allocation2 [shape = 'u8[8192]{0}', space=vmem, size = 0x2000, scoped, tag = 'input window, operand 0, single buffered']
    #allocation3 [shape = 's32[1]{0}', space=sflag, size = 0x4, scoped, tag = 'scoped memory for tpu_custom_call.1']
    #allocation4 [shape = 's32[1]{0}', space=sflag, size = 0x4, scoped, tag = 'scoped memory for tpu_custom_call.1']
    #allocation5 [shape = 'u8[16384]{0}', space=vmem, size = 0x4000, scoped, tag = 'input window, operand 1, single buffered']
    #allocation6 [shape = 's32[1]{0}', space=sflag, size = 0x4, scoped, tag = 'scoped memory for tpu_custom_call.1']
    #allocation7 [shape = 'u8[512]{0}', space=vmem, size = 0x400, scoped, tag = 'input window, operand 2, single buffered']
    #allocation8 [shape = 'u8[32768]{0}', space=vmem, size = 0x8000, scoped, tag = 'input window, operand 3, single buffered']
    #allocation9 [shape = 's32[1]{0}', space=sflag, size = 0x4, scoped, tag = 'scoped memory for tpu_custom_call.1']
    #allocation10 [shape = 'u8[512]{0}', space=vmem, size = 0x400, scoped, tag = 'input window, operand 4, single buffered']
    #allocation11 [shape = 'u8[8192]{0}', space=vmem, size = 0x2000, scoped, tag = 'output window, operand 0, single buffered']
    %10 = vsyncpa [#allocation3], 0
    %11 = vsyncpa [#allocation6], 0
    %12 = vsyncpa [#allocation9], 0
    %13 = vsyncpa [#allocation4], 0
    // Predicated region
    $region2: #{tpu_custom_call.1} parent=1 // pred_check
      _
    $region3: #{tpu_custom_call.1} parent=1 // pred_check_branch
      %15 = sbr.rel (0) target = $region5
    $region4: #{tpu_custom_call.1} parent=1 // pred_region
      %s17 = ssub.s32 256, 256
      %18 = vsyncadd [#allocation3], %s17
      %s19 = sshll.u32 [#allocation2], 4
      %s20 = int_to_ptr.vmem [resolvable:$true] %s19
      %25 = dma.hbm_to_vmem [thread:$0]  %s0, 256, %s20, [#allocation3], 128, 128, 8
    $region5: #{tpu_custom_call.1} parent=1 // pred_fallthru
      _
    // Predicated region
    $region6: #{tpu_custom_call.1} parent=1 // pred_check
      _
    $region7: #{tpu_custom_call.1} parent=1 // pred_check_branch
      %27 = sbr.rel (0) target = $region9
    $region8: #{tpu_custom_call.1} parent=1 // pred_region
      %s29 = ssub.s32 512, 512
      %30 = vsyncadd [#allocation6], %s29
      %s31 = sshll.u32 [#allocation5], 4
      %s32 = int_to_ptr.vmem [resolvable:$true] %s31
      %37 = dma.hbm_to_vmem [thread:$0]  %s1, 512, %s32, [#allocation6], 128, 128, 8
    $region9: #{tpu_custom_call.1} parent=1 // pred_fallthru
      _
    // Predicated region
    $region10: #{tpu_custom_call.1} parent=1 // pred_check
      _
    $region11: #{tpu_custom_call.1} parent=1 // pred_check_branch
      %39 = sbr.rel (0) target = $region13
    $region12: #{tpu_custom_call.1} parent=1 // pred_region
      %s41 = ssub.s32 16, 16
      %42 = vsyncadd [#allocation6], %s41
      %s44 = sshll.u32 [#allocation7], 4
      %s45 = int_to_ptr.vmem [resolvable:$true] %s44
      %47 = dma.hbm_to_vmem [thread:$0]  %s2, 16, %s45, [#allocation6]
    $region13: #{tpu_custom_call.1} parent=1 // pred_fallthru
      _
    // Predicated region
    $region14: #{tpu_custom_call.1} parent=1 // pred_check
      _
    $region15: #{tpu_custom_call.1} parent=1 // pred_check_branch
      %49 = sbr.rel (0) target = $region17
    $region16: #{tpu_custom_call.1} parent=1 // pred_region
      %s51 = ssub.s32 1024, 1024
      %52 = vsyncadd [#allocation9], %s51
      %s53 = sshll.u32 [#allocation8], 4
      %s54 = int_to_ptr.vmem [resolvable:$true] %s53
      %59 = dma.hbm_to_vmem [thread:$0]  %s3, 1024, %s54, [#allocation9], 128, 128, 8
    $region17: #{tpu_custom_call.1} parent=1 // pred_fallthru
      _
    // Predicated region
    $region18: #{tpu_custom_call.1} parent=1 // pred_check
      _
    $region19: #{tpu_custom_call.1} parent=1 // pred_check_branch
      %61 = sbr.rel (0) target = $region21
    $region20: #{tpu_custom_call.1} parent=1 // pred_region
      %s63 = ssub.s32 16, 16
      %64 = vsyncadd [#allocation9], %s63
      %s66 = sshll.u32 [#allocation10], 4
      %s67 = int_to_ptr.vmem [resolvable:$true] %s66
      %69 = dma.hbm_to_vmem [thread:$0]  %s4, 16, %s67, [#allocation9]
    $region21: #{tpu_custom_call.1} parent=1 // pred_fallthru
      _
    // Predicated region
    $region22: #{tpu_custom_call.1} parent=1 // pred_check
      _
    $region23: #{tpu_custom_call.1} parent=1 // pred_check_branch
      %71 = sbr.rel (0) target = $region25
    $region24: #{tpu_custom_call.1} parent=1 // pred_region
      %72 = dma.done [#allocation3], 256
    $region25: #{tpu_custom_call.1} parent=1 // pred_fallthru
      _
    // Predicated region
    $region26: #{tpu_custom_call.1} parent=1 // pred_check
      _
    $region27: #{tpu_custom_call.1} parent=1 // pred_check_branch
      %74 = sbr.rel (0) target = $region29
    $region28: #{tpu_custom_call.1} parent=1 // pred_region
      %75 = dma.done [#allocation6], 512
    $region29: #{tpu_custom_call.1} parent=1 // pred_fallthru
      _
    // Predicated region
    $region30: #{tpu_custom_call.1} parent=1 // pred_check
      _
    $region31: #{tpu_custom_call.1} parent=1 // pred_check_branch
      %77 = sbr.rel (0) target = $region33
    $region32: #{tpu_custom_call.1} parent=1 // pred_region
      %78 = dma.done [#allocation6], 16
    $region33: #{tpu_custom_call.1} parent=1 // pred_fallthru
      _
    // Predicated region
    $region34: #{tpu_custom_call.1} parent=1 // pred_check
      _
    $region35: #{tpu_custom_call.1} parent=1 // pred_check_branch
      %80 = sbr.rel (0) target = $region37
    $region36: #{tpu_custom_call.1} parent=1 // pred_region
      %81 = dma.done [#allocation9], 1024
    $region37: #{tpu_custom_call.1} parent=1 // pred_fallthru
      _
    // Predicated region
    $region38: #{tpu_custom_call.1} parent=1 // pred_check
      _
    $region39: #{tpu_custom_call.1} parent=1 // pred_check_branch
      %83 = sbr.rel (0) target = $region41
    $region40: #{tpu_custom_call.1} parent=1 // pred_region
      %84 = dma.done [#allocation9], 16
    $region41: #{tpu_custom_call.1} parent=1 // pred_fallthru
      _
    %v85 = vld [vmem:[#allocation2] sm:$0xff]
    %v86 = vld [vmem:[#allocation2 + $0x8] sm:$0xff]
    %v87 = vld [vmem:[#allocation5] sm:$0xff]
    %v88 = vld [vmem:[#allocation5 + $0x8] sm:$0xff]
    %v89 = vld [vmem:[#allocation5 + $0x10] sm:$0xff]
    %v90 = vld [vmem:[#allocation5 + $0x18] sm:$0xff]
    %v91 = vld [vmem:[#allocation7] sm:$0x1]
    %v93 = vlaneseq
    %v94 = vshrl.u32 %v93, 7
    %v95 = vsub.s32 0, %v94
    %v96 = vrot.slane %v91, %v95
    %vm98 = vcmask 261120
    %v100 = vsel %vm98, %v85, 0
    %v103 = vsel %vm98, %v86, 0
    %105 = vmatprep.subr.mxu0 0.0
    %106 = vmatpush1.msra.mxu0 %v87
    %107 = vmatprep.subr.mxu0 0.0
    %108 = vmatpush1.msra.mxu0 %v88
    %109 = vmatprep.subr.mxu0 0.0
    %110 = vmatpush1.msra.mxu0 %v89
    %111 = vmatprep.subr.mxu0 0.0
    %112 = vmatpush1.msra.mxu0 %v90
    %113 = vmatprep.subr.mxu0 0.0
    %114 = vmatpush1.msra.mxu0 0.0
    %115 = vmatprep.subr.mxu0 0.0
    %116 = vmatpush1.msra.mxu0 0.0
    %117 = vmatprep.subr.mxu0 0.0
    %118 = vmatpush1.msra.mxu0 0.0
    %119 = vmatprep.subr.mxu0 0.0
    %120 = vmatpush1.msra.mxu0 0.0
    %121 = vmatprep.subr.mxu0 0.0
    %122 = vmatpush1.msra.mxu0 0.0
    %123 = vmatprep.subr.mxu0 0.0
    %124 = vmatpush1.msra.mxu0 0.0
    %125 = vmatprep.subr.mxu0 0.0
    %126 = vmatpush1.msra.mxu0 0.0
    %127 = vmatprep.subr.mxu0 0.0
    %128 = vmatpush1.msra.mxu0 0.0
    %129 = vmatprep.subr.mxu0 0.0
    %130 = vmatpush1.msra.mxu0 0.0
    %131 = vmatprep.subr.mxu0 0.0
    %132 = vmatpush1.msra.mxu0 0.0
    %133 = vmatprep.subr.mxu0 0.0
    %134 = vmatpush1.msra.mxu0 0.0
    %135 = vmatprep.subr.mxu0 0.0
    %136 = vmatpush1.msra.mxu0 0.0
    %137 = vmatprep.subr.mxu0 0.0
    %138 = vmatpush1.msra.mxu0 0.0
    %139 = vmatprep.subr.mxu0 0.0
    %140 = vmatpush1.msra.mxu0 0.0
    %141 = vmatprep.subr.mxu0 0.0
    %142 = vmatpush1.msra.mxu0 0.0
    %143 = vmatprep.subr.mxu0 0.0
    %144 = vmatpush1.msra.mxu0 0.0
    %145 = vmatprep.subr.mxu0 0.0
    %146 = vmatpush1.msra.mxu0 0.0
    %147 = vmatprep.subr.mxu0 0.0
    %148 = vmatpush1.msra.mxu0 0.0
    %149 = vmatprep.subr.mxu0 0.0
    %150 = vmatpush1.msra.mxu0 0.0
    %151 = vmatprep.subr.mxu0 0.0
    %152 = vmatpush1.msra.mxu0 0.0
    %153 = vmatprep.subr.mxu0 0.0
    %154 = vmatpush1.msra.mxu0 0.0
    %155 = vmatprep.subr.mxu0 0.0
    %156 = vmatpush1.msra.mxu0 0.0
    %157 = vmatprep.subr.mxu0 0.0
    %158 = vmatpush1.msra.mxu0 0.0
    %159 = vmatprep.subr.mxu0 0.0
    %160 = vmatpush1.msra.mxu0 0.0
    %161 = vmatprep.subr.mxu0 0.0
    %162 = vmatpush1.msra.mxu0 0.0
    %163 = vmatprep.subr.mxu0 0.0
    %164 = vmatpush1.msra.mxu0 0.0
    %165 = vmatprep.subr.mxu0 0.0
    %166 = vmatpush1.msra.mxu0 0.0
    %167 = vmatprep.subr.mxu0 0.0
    %168 = vmatpush1.msra.mxu0 0.0
    %169 = vmatprep.mubr.f32.mxu0 0.0
    %170 = vmatmul.mubr.f32.gmra.mrb[0].mxu0 %v100
    %v171 = vpop.f32.mrb[0].mxu0
    %v172 = vadd.f32 %v96, %v171
    %v173 = vpop.f32.mrb[0].mxu0
    %174 = vmatprep.mubr.f32.mxu0 0.0
    %175 = vmatmul.mubr.f32.gmra.mrb[0].mxu0 %v103
    %v176 = vpop.f32.mrb[0].mxu0
    %v177 = vadd.f32 %v96, %v176
    %v178 = vpop.f32.mrb[0].mxu0
    %179 = vdwg.mxu0
    %v180 = vmul.f32 %v172, 0.5
    %v181 = vmul.f32 %v177, 0.5
    %v182 = vmul.f32 %v172, 0.044715
    %v183 = vmul.f32 %v177, 0.044715
    %v184 = vmul.f32 %v182, %v172
    %v185 = vmul.f32 %v183, %v177
    %v186 = vmul.f32 %v184, %v172
    %v187 = vmul.f32 %v185, %v177
    %v188 = vadd.f32 %v172, %v186
    %v189 = vadd.f32 %v177, %v187
    %v190 = vmul.f32 %v188, 0.7978846
    %v191 = vmul.f32 %v189, 0.7978846
    %v192 = vtanh.pop %v190
    %v193 = vtanh.pop %v191
    %v194 = vadd.f32 %v192, 1.0
    %v195 = vadd.f32 %v193, 1.0
    %v196 = vmul.f32 %v180, %v194
    %v197 = vmul.f32 %v181, %v195
    %v198 = vld [vmem:[#allocation8] sm:$0xff]
    %v199 = vld [vmem:[#allocation8 + $0x8] sm:$0xff]
    %v200 = vld [vmem:[#allocation8 + $0x10] sm:$0xff]
    %v201 = vld [vmem:[#allocation8 + $0x18] sm:$0xff]
    %v202 = vld [vmem:[#allocation8 + $0x20] sm:$0xff]
    %v203 = vld [vmem:[#allocation8 + $0x28] sm:$0xff]
    %v204 = vld [vmem:[#allocation8 + $0x30] sm:$0xff]
    %v205 = vld [vmem:[#allocation8 + $0x38] sm:$0xff]
    %v206 = vld [vmem:[#allocation10] sm:$0x1]
    %v208 = vlaneseq
    %v209 = vshrl.u32 %v208, 7
    %v210 = vsub.s32 0, %v209
    %v211 = vrot.slane %v206, %v210
    %vm213 = vcmask 523264
    %v215 = vsel %vm213, %v196, 0
    %v218 = vsel %vm213, %v197, 0
    %220 = vmatprep.subr.mxu0 0.0
    %221 = vmatpush1.msra.mxu0 %v198
    %222 = vmatprep.subr.mxu0 0.0
    %223 = vmatpush1.msra.mxu0 %v199
    %224 = vmatprep.subr.mxu0 0.0
    %225 = vmatpush1.msra.mxu0 %v200
    %226 = vmatprep.subr.mxu0 0.0
    %227 = vmatpush1.msra.mxu0 %v201
    %228 = vmatprep.subr.mxu0 0.0
    %229 = vmatpush1.msra.mxu0 %v202
    %230 = vmatprep.subr.mxu0 0.0
    %231 = vmatpush1.msra.mxu0 %v203
    %232 = vmatprep.subr.mxu0 0.0
    %233 = vmatpush1.msra.mxu0 %v204
    %234 = vmatprep.subr.mxu0 0.0
    %235 = vmatpush1.msra.mxu0 %v205
    %236 = vmatprep.subr.mxu0 0.0
    %237 = vmatpush1.msra.mxu0 0.0
    %238 = vmatprep.subr.mxu0 0.0
    %239 = vmatpush1.msra.mxu0 0.0
    %240 = vmatprep.subr.mxu0 0.0
    %241 = vmatpush1.msra.mxu0 0.0
    %242 = vmatprep.subr.mxu0 0.0
    %243 = vmatpush1.msra.mxu0 0.0
    %244 = vmatprep.subr.mxu0 0.0
    %245 = vmatpush1.msra.mxu0 0.0
    %246 = vmatprep.subr.mxu0 0.0
    %247 = vmatpush1.msra.mxu0 0.0
    %248 = vmatprep.subr.mxu0 0.0
    %249 = vmatpush1.msra.mxu0 0.0
    %250 = vmatprep.subr.mxu0 0.0
    %251 = vmatpush1.msra.mxu0 0.0
    %252 = vmatprep.subr.mxu0 0.0
    %253 = vmatpush1.msra.mxu0 0.0
    %254 = vmatprep.subr.mxu0 0.0
    %255 = vmatpush1.msra.mxu0 0.0
    %256 = vmatprep.subr.mxu0 0.0
    %257 = vmatpush1.msra.mxu0 0.0
    %258 = vmatprep.subr.mxu0 0.0
    %259 = vmatpush1.msra.mxu0 0.0
    %260 = vmatprep.subr.mxu0 0.0
    %261 = vmatpush1.msra.mxu0 0.0
    %262 = vmatprep.subr.mxu0 0.0
    %263 = vmatpush1.msra.mxu0 0.0
    %264 = vmatprep.subr.mxu0 0.0
    %265 = vmatpush1.msra.mxu0 0.0
    %266 = vmatprep.subr.mxu0 0.0
    %267 = vmatpush1.msra.mxu0 0.0
    %268 = vmatprep.subr.mxu0 0.0
    %269 = vmatpush1.msra.mxu0 0.0
    %270 = vmatprep.subr.mxu0 0.0
    %271 = vmatpush1.msra.mxu0 0.0
    %272 = vmatprep.subr.mxu0 0.0
    %273 = vmatpush1.msra.mxu0 0.0
    %274 = vmatprep.subr.mxu0 0.0
    %275 = vmatpush1.msra.mxu0 0.0
    %276 = vmatprep.subr.mxu0 0.0
    %277 = vmatpush1.msra.mxu0 0.0
    %278 = vmatprep.subr.mxu0 0.0
    %279 = vmatpush1.msra.mxu0 0.0
    %280 = vmatprep.subr.mxu0 0.0
    %281 = vmatpush1.msra.mxu0 0.0
    %282 = vmatprep.subr.mxu0 0.0
    %283 = vmatpush1.msra.mxu0 0.0
    %284 = vmatprep.mubr.f32.mxu0 0.0
    %285 = vmatmul.mubr.f32.gmra.mrb[0].mxu0 %v215
    %v286 = vpop.f32.mrb[0].mxu0
    %v287 = vadd.f32 %v211, %v286
    %v288 = vpop.f32.mrb[0].mxu0
    %289 = vmatprep.mubr.f32.mxu0 0.0
    %290 = vmatmul.mubr.f32.gmra.mrb[0].mxu0 %v218
    %v291 = vpop.f32.mrb[0].mxu0
    %v292 = vadd.f32 %v211, %v291
    %v293 = vpop.f32.mrb[0].mxu0
    %294 = vdwg.mxu0
    %295 = vst.msk [vmem:[#allocation11] sm:$0xff] %vm98, %v287
    %296 = vst.msk [vmem:[#allocation11 + $0x8] sm:$0xff] %vm98, %v292
    // Predicated region
    $region42: #{tpu_custom_call.1} parent=1 // pred_check
      _
    $region43: #{tpu_custom_call.1} parent=1 // pred_check_branch
      %298 = sbr.rel (0) target = $region45
    $region44: #{tpu_custom_call.1} parent=1 // pred_region
      %s300 = ssub.s32 256, 256
      %301 = vsyncadd [#allocation4], %s300
      %s302 = sshll.u32 [#allocation11], 4
      %s303 = int_to_ptr.vmem [resolvable:$true] %s302
      %308 = dma.vmem_to_hbm [thread:$0]  %s303, 256, %s5, [#allocation4], 128, 128, 8
    $region45: #{tpu_custom_call.1} parent=1 // pred_fallthru
      _
    // Predicated region
    $region46: #{tpu_custom_call.1} parent=1 // pred_check
      _
    $region47: #{tpu_custom_call.1} parent=1 // pred_check_branch
      %310 = sbr.rel (0) target = $region49
    $region48: #{tpu_custom_call.1} parent=1 // pred_region
      %311 = dma.done [#allocation4], 256
    $region49: #{tpu_custom_call.1} parent=1 // pred_fallthru
      _
    %312 = vsyncpa [#allocation3], 1
    %313 = vsyncpa [#allocation6], 1
    %314 = vsyncpa [#allocation9], 1
    %315 = vsyncpa [#allocation4], 1

// kernel: tpu_custom_call.1
$region0: #{tpu_custom_call.1}
  #allocation0 [shape = 'u32[]', space=smem, size = 0x4, offset = 0x4, fixed_abs, tag = 'smem constant byte address 0x4 - core index']
  #allocation1 [shape = 'u32[144,128]{1,0:T(1,128)}', space=vmem, size = 0x12000, scoped, tag = 'internal scratch']
  %s0 = inlined_call_operand.hbm [shape: f32[16,32], index: 0, kind: input, shape index: {}]
  %s1 = inlined_call_operand.hbm [shape: f32[32,64], index: 1, kind: input, shape index: {}]
  %s2 = inlined_call_operand.hbm [shape: f32[1,64], index: 2, kind: input, shape index: {}]
  %s3 = inlined_call_operand.hbm [shape: f32[64,32], index: 3, kind: input, shape index: {}]
  %s4 = inlined_call_operand.hbm [shape: f32[1,32], index: 4, kind: input, shape index: {}]
  %s5 = inlined_call_operand.hbm [shape: f32[16,32], index: 5, kind: output, shape index: {}]
  %s6 = sld [smem:[#allocation0]]
  $region50: #{tpu_custom_call.1} parent=0
    _
  %s8 = ssub.s32 1, %s6
  %s9 = scalar_select 0, %s8, %s6
  $region1: #{tpu_custom_call.1} parent=0
    #allocation2 [shape = 'u8[8192]{0}', space=vmem, size = 0x2000, scoped, tag = 'input window, operand 0, single buffered']
    #allocation3 [shape = 's32[1]{0}', space=sflag, size = 0x4, scoped, tag = 'scoped memory for tpu_custom_call.1']
    #allocation4 [shape = 's32[1]{0}', space=sflag, size = 0x4, scoped, tag = 'scoped memory for tpu_custom_call.1']
    #allocation5 [shape = 'u8[16384]{0}', space=vmem, size = 0x4000, scoped, tag = 'input window, operand 1, single buffered']
    #allocation6 [shape = 's32[1]{0}', space=sflag, size = 0x4, scoped, tag = 'scoped memory for tpu_custom_call.1']
    #allocation7 [shape = 'u8[512]{0}', space=vmem, size = 0x400, scoped, tag = 'input window, operand 2, single buffered']
    #allocation8 [shape = 'u8[32768]{0}', space=vmem, size = 0x8000, scoped, tag = 'input window, operand 3, single buffered']
    #allocation9 [shape = 's32[1]{0}', space=sflag, size = 0x4, scoped, tag = 'scoped memory for tpu_custom_call.1']
    #allocation10 [shape = 'u8[512]{0}', space=vmem, size = 0x400, scoped, tag = 'input window, operand 4, single buffered']
    #allocation11 [shape = 'u8[8192]{0}', space=vmem, size = 0x2000, scoped, tag = 'output window, operand 0, single buffered']
    %10 = vsyncpa [#allocation3], 0
    %11 = vsyncpa [#allocation6], 0
    %12 = vsyncpa [#allocation9], 0
    %13 = vsyncpa [#allocation4], 0
    // Predicated region
    $region2: #{tpu_custom_call.1} parent=1 // pred_check
      _
    $region3: #{tpu_custom_call.1} parent=1 // pred_check_branch
      %15 = sbr.rel (0) target = $region5
    $region4: #{tpu_custom_call.1} parent=1 // pred_region
      %s17 = ssub.s32 256, 256
      %18 = vsyncadd [#allocation3], %s17
      %s19 = sshll.u32 [#allocation2], 4
      %s20 = int_to_ptr.vmem [resolvable:$true] %s19
      %25 = dma.hbm_to_vmem [thread:$0]  %s0, 256, %s20, [#allocation3], 128, 128, 8
    $region5: #{tpu_custom_call.1} parent=1 // pred_fallthru
      _
    // Predicated region
    $region6: #{tpu_custom_call.1} parent=1 // pred_check
      _
    $region7: #{tpu_custom_call.1} parent=1 // pred_check_branch
      %27 = sbr.rel (0) target = $region9
    $region8: #{tpu_custom_call.1} parent=1 // pred_region
      %s29 = ssub.s32 512, 512
      %30 = vsyncadd [#allocation6], %s29
      %s31 = sshll.u32 [#allocation5], 4
      %s32 = int_to_ptr.vmem [resolvable:$true] %s31
      %37 = dma.hbm_to_vmem [thread:$0]  %s1, 512, %s32, [#allocation6], 128, 128, 8
    $region9: #{tpu_custom_call.1} parent=1 // pred_fallthru
      _
    // Predicated region
    $region10: #{tpu_custom_call.1} parent=1 // pred_check
      _
    $region11: #{tpu_custom_call.1} parent=1 // pred_check_branch
      %39 = sbr.rel (0) target = $region13
    $region12: #{tpu_custom_call.1} parent=1 // pred_region
      %s41 = ssub.s32 16, 16
      %42 = vsyncadd [#allocation6], %s41
      %s44 = sshll.u32 [#allocation7], 4
      %s45 = int_to_ptr.vmem [resolvable:$true] %s44
      %47 = dma.hbm_to_vmem [thread:$0]  %s2, 16, %s45, [#allocation6]
    $region13: #{tpu_custom_call.1} parent=1 // pred_fallthru
      _
    // Predicated region
    $region14: #{tpu_custom_call.1} parent=1 // pred_check
      _
    $region15: #{tpu_custom_call.1} parent=1 // pred_check_branch
      %49 = sbr.rel (0) target = $region17
    $region16: #{tpu_custom_call.1} parent=1 // pred_region
      %s51 = ssub.s32 1024, 1024
      %52 = vsyncadd [#allocation9], %s51
      %s53 = sshll.u32 [#allocation8], 4
      %s54 = int_to_ptr.vmem [resolvable:$true] %s53
      %59 = dma.hbm_to_vmem [thread:$0]  %s3, 1024, %s54, [#allocation9], 128, 128, 8
    $region17: #{tpu_custom_call.1} parent=1 // pred_fallthru
      _
    // Predicated region
    $region18: #{tpu_custom_call.1} parent=1 // pred_check
      _
    $region19: #{tpu_custom_call.1} parent=1 // pred_check_branch
      %61 = sbr.rel (0) target = $region21
    $region20: #{tpu_custom_call.1} parent=1 // pred_region
      %s63 = ssub.s32 16, 16
      %64 = vsyncadd [#allocation9], %s63
      %s66 = sshll.u32 [#allocation10], 4
      %s67 = int_to_ptr.vmem [resolvable:$true] %s66
      %69 = dma.hbm_to_vmem [thread:$0]  %s4, 16, %s67, [#allocation9]
    $region21: #{tpu_custom_call.1} parent=1 // pred_fallthru
      _
    // Predicated region
    $region22: #{tpu_custom_call.1} parent=1 // pred_check
      _
    $region23: #{tpu_custom_call.1} parent=1 // pred_check_branch
      %71 = sbr.rel (0) target = $region25
    $region24: #{tpu_custom_call.1} parent=1 // pred_region
      %72 = dma.done [#allocation3], 256
    $region25: #{tpu_custom_call.1} parent=1 // pred_fallthru
      _
    // Predicated region
    $region26: #{tpu_custom_call.1} parent=1 // pred_check
      _
    $region27: #{tpu_custom_call.1} parent=1 // pred_check_branch
      %74 = sbr.rel (0) target = $region29
    $region28: #{tpu_custom_call.1} parent=1 // pred_region
      %75 = dma.done [#allocation6], 512
    $region29: #{tpu_custom_call.1} parent=1 // pred_fallthru
      _
    // Predicated region
    $region30: #{tpu_custom_call.1} parent=1 // pred_check
      _
    $region31: #{tpu_custom_call.1} parent=1 // pred_check_branch
      %77 = sbr.rel (0) target = $region33
    $region32: #{tpu_custom_call.1} parent=1 // pred_region
      %78 = dma.done [#allocation6], 16
    $region33: #{tpu_custom_call.1} parent=1 // pred_fallthru
      _
    // Predicated region
    $region34: #{tpu_custom_call.1} parent=1 // pred_check
      _
    $region35: #{tpu_custom_call.1} parent=1 // pred_check_branch
      %80 = sbr.rel (0) target = $region37
    $region36: #{tpu_custom_call.1} parent=1 // pred_region
      %81 = dma.done [#allocation9], 1024
    $region37: #{tpu_custom_call.1} parent=1 // pred_fallthru
      _
    // Predicated region
    $region38: #{tpu_custom_call.1} parent=1 // pred_check
      _
    $region39: #{tpu_custom_call.1} parent=1 // pred_check_branch
      %83 = sbr.rel (0) target = $region41
    $region40: #{tpu_custom_call.1} parent=1 // pred_region
      %84 = dma.done [#allocation9], 16
    $region41: #{tpu_custom_call.1} parent=1 // pred_fallthru
      _
    %v85 = vld [vmem:[#allocation2] sm:$0xff]
    %v86 = vld [vmem:[#allocation2 + $0x8] sm:$0xff]
    %v87 = vld [vmem:[#allocation5] sm:$0xff]
    %v88 = vld [vmem:[#allocation5 + $0x8] sm:$0xff]
    %v89 = vld [vmem:[#allocation5 + $0x10] sm:$0xff]
    %v90 = vld [vmem:[#allocation5 + $0x18] sm:$0xff]
    %v91 = vld [vmem:[#allocation7] sm:$0x1]
    %v93 = vlaneseq
    %v94 = vshrl.u32 %v93, 7
    %v95 = vsub.s32 0, %v94
    %v96 = vrot.slane %v91, %v95
    %vm98 = vcmask 261120
    %v100 = vsel %vm98, %v85, 0
    %v103 = vsel %vm98, %v86, 0
    %105 = vmatprep.subr.mxu0 0.0
    %106 = vmatpush1.msra.mxu0 %v87
    %107 = vmatprep.subr.mxu0 0.0
    %108 = vmatpush1.msra.mxu0 %v88
    %109 = vmatprep.subr.mxu0 0.0
    %110 = vmatpush1.msra.mxu0 %v89
    %111 = vmatprep.subr.mxu0 0.0
    %112 = vmatpush1.msra.mxu0 %v90
    %113 = vmatprep.subr.mxu0 0.0
    %114 = vmatpush1.msra.mxu0 0.0
    %115 = vmatprep.subr.mxu0 0.0
    %116 = vmatpush1.msra.mxu0 0.0
    %117 = vmatprep.subr.mxu0 0.0
    %118 = vmatpush1.msra.mxu0 0.0
    %119 = vmatprep.subr.mxu0 0.0
    %120 = vmatpush1.msra.mxu0 0.0
    %121 = vmatprep.subr.mxu0 0.0
    %122 = vmatpush1.msra.mxu0 0.0
    %123 = vmatprep.subr.mxu0 0.0
    %124 = vmatpush1.msra.mxu0 0.0
    %125 = vmatprep.subr.mxu0 0.0
    %126 = vmatpush1.msra.mxu0 0.0
    %127 = vmatprep.subr.mxu0 0.0
    %128 = vmatpush1.msra.mxu0 0.0
    %129 = vmatprep.subr.mxu0 0.0
    %130 = vmatpush1.msra.mxu0 0.0
    %131 = vmatprep.subr.mxu0 0.0
    %132 = vmatpush1.msra.mxu0 0.0
    %133 = vmatprep.subr.mxu0 0.0
    %134 = vmatpush1.msra.mxu0 0.0
    %135 = vmatprep.subr.mxu0 0.0
    %136 = vmatpush1.msra.mxu0 0.0
    %137 = vmatprep.subr.mxu0 0.0
    %138 = vmatpush1.msra.mxu0 0.0
    %139 = vmatprep.subr.mxu0 0.0
    %140 = vmatpush1.msra.mxu0 0.0
    %141 = vmatprep.subr.mxu0 0.0
    %142 = vmatpush1.msra.mxu0 0.0
    %143 = vmatprep.subr.mxu0 0.0
    %144 = vmatpush1.msra.mxu0 0.0
    %145 = vmatprep.subr.mxu0 0.0
    %146 = vmatpush1.msra.mxu0 0.0
    %147 = vmatprep.subr.mxu0 0.0
    %148 = vmatpush1.msra.mxu0 0.0
    %149 = vmatprep.subr.mxu0 0.0
    %150 = vmatpush1.msra.mxu0 0.0
    %151 = vmatprep.subr.mxu0 0.0
    %152 = vmatpush1.msra.mxu0 0.0
    %153 = vmatprep.subr.mxu0 0.0
    %154 = vmatpush1.msra.mxu0 0.0
    %155 = vmatprep.subr.mxu0 0.0
    %156 = vmatpush1.msra.mxu0 0.0
    %157 = vmatprep.subr.mxu0 0.0
    %158 = vmatpush1.msra.mxu0 0.0
    %159 = vmatprep.subr.mxu0 0.0
    %160 = vmatpush1.msra.mxu0 0.0
    %161 = vmatprep.subr.mxu0 0.0
    %162 = vmatpush1.msra.mxu0 0.0
    %163 = vmatprep.subr.mxu0 0.0
    %164 = vmatpush1.msra.mxu0 0.0
    %165 = vmatprep.subr.mxu0 0.0
    %166 = vmatpush1.msra.mxu0 0.0
    %167 = vmatprep.subr.mxu0 0.0
    %168 = vmatpush1.msra.mxu0 0.0
    %169 = vmatprep.mubr.f32.mxu0 0.0
    %170 = vmatmul.mubr.f32.gmra.mrb[0].mxu0 %v100
    %v171 = vpop.f32.mrb[0].mxu0
    %v172 = vadd.f32 %v96, %v171
    %v173 = vpop.f32.mrb[0].mxu0
    %174 = vmatprep.mubr.f32.mxu0 0.0
    %175 = vmatmul.mubr.f32.gmra.mrb[0].mxu0 %v103
    %v176 = vpop.f32.mrb[0].mxu0
    %v177 = vadd.f32 %v96, %v176
    %v178 = vpop.f32.mrb[0].mxu0
    %179 = vdwg.mxu0
    %v180 = vmul.f32 %v172, 0.5
    %v181 = vmul.f32 %v177, 0.5
    %v182 = vmul.f32 %v172, 0.044715
    %v183 = vmul.f32 %v177, 0.044715
    %v184 = vmul.f32 %v182, %v172
    %v185 = vmul.f32 %v183, %v177
    %v186 = vmul.f32 %v184, %v172
    %v187 = vmul.f32 %v185, %v177
    %v188 = vadd.f32 %v172, %v186
    %v189 = vadd.f32 %v177, %v187
    %v190 = vmul.f32 %v188, 0.7978846
    %v191 = vmul.f32 %v189, 0.7978846
    %v192 = vtanh.pop %v190
    %v193 = vtanh.pop %v191
    %v194 = vadd.f32 %v192, 1.0
    %v195 = vadd.f32 %v193, 1.0
    %v196 = vmul.f32 %v180, %v194
    %v197 = vmul.f32 %v181, %v195
    %v198 = vld [vmem:[#allocation8] sm:$0xff]
    %v199 = vld [vmem:[#allocation8 + $0x8] sm:$0xff]
    %v200 = vld [vmem:[#allocation8 + $0x10] sm:$0xff]
    %v201 = vld [vmem:[#allocation8 + $0x18] sm:$0xff]
    %v202 = vld [vmem:[#allocation8 + $0x20] sm:$0xff]
    %v203 = vld [vmem:[#allocation8 + $0x28] sm:$0xff]
    %v204 = vld [vmem:[#allocation8 + $0x30] sm:$0xff]
    %v205 = vld [vmem:[#allocation8 + $0x38] sm:$0xff]
    %v206 = vld [vmem:[#allocation10] sm:$0x1]
    %v208 = vlaneseq
    %v209 = vshrl.u32 %v208, 7
    %v210 = vsub.s32 0, %v209
    %v211 = vrot.slane %v206, %v210
    %vm213 = vcmask 523264
    %v215 = vsel %vm213, %v196, 0
    %v218 = vsel %vm213, %v197, 0
    %220 = vmatprep.subr.mxu0 0.0
    %221 = vmatpush1.msra.mxu0 %v198
    %222 = vmatprep.subr.mxu0 0.0
    %223 = vmatpush1.msra.mxu0 %v199
    %224 = vmatprep.subr.mxu0 0.0
    %225 = vmatpush1.msra.mxu0 %v200
    %226 = vmatprep.subr.mxu0 0.0
    %227 = vmatpush1.msra.mxu0 %v201
    %228 = vmatprep.subr.mxu0 0.0
    %229 = vmatpush1.msra.mxu0 %v202
    %230 = vmatprep.subr.mxu0 0.0
    %231 = vmatpush1.msra.mxu0 %v203
    %232 = vmatprep.subr.mxu0 0.0
    %233 = vmatpush1.msra.mxu0 %v204
    %234 = vmatprep.subr.mxu0 0.0
    %235 = vmatpush1.msra.mxu0 %v205
    %236 = vmatprep.subr.mxu0 0.0
    %237 = vmatpush1.msra.mxu0 0.0
    %238 = vmatprep.subr.mxu0 0.0
    %239 = vmatpush1.msra.mxu0 0.0
    %240 = vmatprep.subr.mxu0 0.0
    %241 = vmatpush1.msra.mxu0 0.0
    %242 = vmatprep.subr.mxu0 0.0
    %243 = vmatpush1.msra.mxu0 0.0
    %244 = vmatprep.subr.mxu0 0.0
    %245 = vmatpush1.msra.mxu0 0.0
    %246 = vmatprep.subr.mxu0 0.0
    %247 = vmatpush1.msra.mxu0 0.0
    %248 = vmatprep.subr.mxu0 0.0
    %249 = vmatpush1.msra.mxu0 0.0
    %250 = vmatprep.subr.mxu0 0.0
    %251 = vmatpush1.msra.mxu0 0.0
    %252 = vmatprep.subr.mxu0 0.0
    %253 = vmatpush1.msra.mxu0 0.0
    %254 = vmatprep.subr.mxu0 0.0
    %255 = vmatpush1.msra.mxu0 0.0
    %256 = vmatprep.subr.mxu0 0.0
    %257 = vmatpush1.msra.mxu0 0.0
    %258 = vmatprep.subr.mxu0 0.0
    %259 = vmatpush1.msra.mxu0 0.0
    %260 = vmatprep.subr.mxu0 0.0
    %261 = vmatpush1.msra.mxu0 0.0
    %262 = vmatprep.subr.mxu0 0.0
    %263 = vmatpush1.msra.mxu0 0.0
    %264 = vmatprep.subr.mxu0 0.0
    %265 = vmatpush1.msra.mxu0 0.0
    %266 = vmatprep.subr.mxu0 0.0
    %267 = vmatpush1.msra.mxu0 0.0
    %268 = vmatprep.subr.mxu0 0.0
    %269 = vmatpush1.msra.mxu0 0.0
    %270 = vmatprep.subr.mxu0 0.0
    %271 = vmatpush1.msra.mxu0 0.0
    %272 = vmatprep.subr.mxu0 0.0
    %273 = vmatpush1.msra.mxu0 0.0
    %274 = vmatprep.subr.mxu0 0.0
    %275 = vmatpush1.msra.mxu0 0.0
    %276 = vmatprep.subr.mxu0 0.0
    %277 = vmatpush1.msra.mxu0 0.0
    %278 = vmatprep.subr.mxu0 0.0
    %279 = vmatpush1.msra.mxu0 0.0
    %280 = vmatprep.subr.mxu0 0.0
    %281 = vmatpush1.msra.mxu0 0.0
    %282 = vmatprep.subr.mxu0 0.0
    %283 = vmatpush1.msra.mxu0 0.0
    %284 = vmatprep.mubr.f32.mxu0 0.0
    %285 = vmatmul.mubr.f32.gmra.mrb[0].mxu0 %v215
    %v286 = vpop.f32.mrb[0].mxu0
    %v287 = vadd.f32 %v211, %v286
    %v288 = vpop.f32.mrb[0].mxu0
    %289 = vmatprep.mubr.f32.mxu0 0.0
    %290 = vmatmul.mubr.f32.gmra.mrb[0].mxu0 %v218
    %v291 = vpop.f32.mrb[0].mxu0
    %v292 = vadd.f32 %v211, %v291
    %v293 = vpop.f32.mrb[0].mxu0
    %294 = vdwg.mxu0
    %295 = vst.msk [vmem:[#allocation11] sm:$0xff] %vm98, %v287
    %296 = vst.msk [vmem:[#allocation11 + $0x8] sm:$0xff] %vm98, %v292
    // Predicated region
    $region42: #{tpu_custom_call.1} parent=1 // pred_check
      _
    $region43: #{tpu_custom_call.1} parent=1 // pred_check_branch
      %298 = sbr.rel (0) target = $region45
    $region44: #{tpu_custom_call.1} parent=1 // pred_region
      %s300 = ssub.s32 256, 256
      %301 = vsyncadd [#allocation4], %s300
      %s302 = sshll.u32 [#allocation11], 4
      %s303 = int_to_ptr.vmem [resolvable:$true] %s302
      %308 = dma.vmem_to_hbm [thread:$0]  %s303, 256, %s5, [#allocation4], 128, 128, 8
    $region45: #{tpu_custom_call.1} parent=1 // pred_fallthru
      _
    // Predicated region
    $region46: #{tpu_custom_call.1} parent=1 // pred_check
      _
    $region47: #{tpu_custom_call.1} parent=1 // pred_check_branch
      %310 = sbr.rel (0) target = $region49
    $region48: #{tpu_custom_call.1} parent=1 // pred_region
      %311 = dma.done [#allocation4], 256
    $region49: #{tpu_custom_call.1} parent=1 // pred_fallthru
      _
    %312 = vsyncpa [#allocation3], 1
    %313 = vsyncpa [#allocation6], 1
    %314 = vsyncpa [#allocation9], 1
    %315 = vsyncpa [#allocation4], 1

</llo_original>
